<compile_context>
chip_gen: v7x
topology: tpu7x:2x2x1
jax: 0.10.0
libtpu: 0.0.40
codegen_flags: <defaults>
</compile_context>

<pallas_src>
import jax
import jax.numpy as jnp
from jax import lax
from jax.experimental import pallas as pl
from jax.experimental.pallas import tpu as pltpu

_LN_EPS = 1e-5
_C_PAD = 128          # lane-dense classifier width (padded, sliced in wrapper)
_NEG_BIG = -1e30      # finite "masked" score (avoids inf-inf NaN paths)


def _round_up(x, m):
    return ((x + m - 1) // m) * m


def _choose_seq_tiling(seq_len, target):
    """Split seq into n tiles of a multiple-of-16 size with minimal padding."""
    n_tiles = max(1, -(-seq_len // max(16, target)))
    s_tile = _round_up(-(-seq_len // n_tiles), 16)
    return s_tile, n_tiles, s_tile * n_tiles


def _make_intent_head_kernel(seq_len, seq_tile, need_mask):
    """Kernel closure over static sequence length / tile for row masking."""

    def kernel(h_ref, gw_ref, bias_ref, fcw_ref, fcb_ref, out_ref,
               m_sc, l_sc, acc_sc):
        # h_ref:   (1, S_TILE, H) hidden-state tile, native dtype (bf16/f32)
        # gw_ref:  (1, H) f32   = gamma * attn_w   (folded)
        # bias_ref:(1,)  f32 SMEM = attn_w . beta + attn_b (folded)
        # fcw_ref: (H, C_PAD) f32 = (fc_w * gamma).T padded lane-dense
        # fcb_ref: (1, C_PAD) f32 = fc_b + fc_w @ beta, padded
        # out_ref: (1, 1, C_PAD)
        # scratch: m_sc (1,1), l_sc (1,1), acc_sc (1,H)  online-softmax state
        s = pl.program_id(1)
        n_s = pl.num_programs(1)

        @pl.when(s == 0)
        def _init():
            m_sc[...] = jnp.full_like(m_sc, -jnp.inf)
            l_sc[...] = jnp.zeros_like(l_sc)
            acc_sc[...] = jnp.zeros_like(acc_sc)

        h = h_ref[0].astype(jnp.float32)                       # (S_TILE, H)

        # ---- LayerNorm statistics (two-pass variance; affine folded out) ----
        mean = jnp.mean(h, axis=-1, keepdims=True)             # (S_TILE, 1)
        d = h - mean
        var = jnp.mean(d * d, axis=-1, keepdims=True)
        y = d * lax.rsqrt(var + _LN_EPS)                       # (S_TILE, H)

        # ---- attention scores on the MXU: (1,H) . (S_TILE,H)^T -> (1,S_TILE)
        scores = lax.dot_general(
            gw_ref[...], y, (((1,), (1,)), ((), ())),
            preferred_element_type=jnp.float32) + bias_ref[0]  # (1, S_TILE)

        if need_mask:
            col = lax.broadcasted_iota(jnp.int32, (1, seq_tile), 1)
            col = col + s * seq_tile
            scores = jnp.where(col < seq_len, scores, _NEG_BIG)

        # ---- online softmax over the streamed sequence axis ----
        m_prev = m_sc[...]                                     # (1, 1)
        m_new = jnp.maximum(m_prev, jnp.max(scores, axis=-1, keepdims=True))
        corr = jnp.exp(m_prev - m_new)                         # (1, 1)
        p = jnp.exp(scores - m_new)                            # (1, S_TILE)
        l_sc[...] = corr * l_sc[...] + jnp.sum(p, axis=-1, keepdims=True)
        acc_sc[...] = corr * acc_sc[...] + jnp.dot(
            p, y, preferred_element_type=jnp.float32)          # (1, H) via MXU
        m_sc[...] = m_new

        # ---- finalize: normalize, classify (dropout = identity in eval) ----
        @pl.when(s == n_s - 1)
        def _finalize():
            pooled = acc_sc[...] / l_sc[...]                   # exact, once
            logits = jnp.dot(pooled, fcw_ref[...],
                             preferred_element_type=jnp.float32) + fcb_ref[...]
            out_ref[0] = logits.astype(out_ref.dtype)          # (1, C_PAD)

    return kernel


def wav2vec_intent_head(hidden_states, ln_gamma, ln_beta,
                        attn_w, attn_b, fc_w, fc_b,
                        seq_tile_target=1024):
    """hidden_states: (B, S, H) float. Returns (B, num_classes) f32 logits."""
    B, S, H = hidden_states.shape
    C = fc_w.shape[0]

    S_TILE, n_s, S_pad = _choose_seq_tiling(S, seq_tile_target)
    need_mask = S_pad != S
    hs = hidden_states
    if need_mask:
        hs = jnp.pad(hidden_states, ((0, 0), (0, S_pad - S), (0, 0)))

    # ---- fold LayerNorm affine + attention bias into downstream params ----
    gamma = ln_gamma.reshape(-1).astype(jnp.float32)            # (H,)
    beta = ln_beta.reshape(-1).astype(jnp.float32)              # (H,)
    aw = attn_w.reshape(-1).astype(jnp.float32)                 # (H,)
    gw = (gamma * aw).reshape(1, H)                              # score vector
    b_fold = (jnp.dot(aw, beta)
              + attn_b.reshape(()).astype(jnp.float32)).reshape(1)

    fcw = fc_w.astype(jnp.float32)                               # (C, H)
    fcb = fc_b.reshape(-1).astype(jnp.float32)                   # (C,)
    fc_w_eff = (fcw * gamma[None, :]).T                          # (H, C)
    fc_b_eff = fcb + fcw @ beta                                  # (C,)
    fc_w_pad = jnp.zeros((H, _C_PAD), jnp.float32).at[:, :C].set(fc_w_eff)
    fc_b_pad = jnp.zeros((1, _C_PAD), jnp.float32).at[0, :C].set(fc_b_eff)

    # ---- VMEM budget: double-buffered input tile + f32 intermediates + params
    itemsize = jnp.dtype(hidden_states.dtype).itemsize
    tile_in = S_TILE * H * itemsize
    interm = 5 * S_TILE * H * 4
    params = 4 * (H + H * _C_PAD + _C_PAD + 8)
    vmem_limit = int(min(48 << 20,
                         max(4 << 20, 2 * tile_in + interm + 2 * params
                             + (2 << 20))))

    kernel = _make_intent_head_kernel(S, S_TILE, need_mask)

    out = pl.pallas_call(
        kernel,
        out_shape=jax.ShapeDtypeStruct((B, 1, _C_PAD), jnp.float32),
        grid_spec=pltpu.PrefetchScalarGridSpec(
            num_scalar_prefetch=0,
            grid=(B, n_s),
            in_specs=[
                pl.BlockSpec((1, S_TILE, H), lambda b, s: (b, s, 0)),   # hidden
                pl.BlockSpec((1, H), lambda b, s: (0, 0)),              # gw
                pl.BlockSpec(memory_space=pltpu.MemorySpace.SMEM),      # bias
                pl.BlockSpec((H, _C_PAD), lambda b, s: (0, 0)),         # fc_w
                pl.BlockSpec((1, _C_PAD), lambda b, s: (0, 0)),         # fc_b
            ],
            out_specs=pl.BlockSpec((1, 1, _C_PAD), lambda b, s: (b, 0, 0)),
            scratch_shapes=[
                pltpu.VMEM((1, 1), jnp.float32),    # running max m
                pltpu.VMEM((1, 1), jnp.float32),    # running denom l
                pltpu.VMEM((1, H), jnp.float32),    # running weighted sum
            ],
        ),
        compiler_params=pltpu.CompilerParams(
            dimension_semantics=("parallel", "arbitrary"),
            vmem_limit_bytes=vmem_limit,
        ),
    )(hs, gw, b_fold, fc_w_pad, fc_b_pad)

    return out.reshape(B, _C_PAD)[:, :C]


def _reference_head(hidden_states, ln_gamma, ln_beta, attn_w, attn_b, fc_w, fc_b):
    h = hidden_states.astype(jnp.float32)
    mean = jnp.mean(h, axis=-1, keepdims=True)
    var = jnp.mean((h - mean) ** 2, axis=-1, keepdims=True)
    normed = (h - mean) * lax.rsqrt(var + _LN_EPS)
    normed = normed * ln_gamma.astype(jnp.float32) + ln_beta.astype(jnp.float32)
    scores = jnp.einsum("bsh,h->bs", normed, attn_w.reshape(-1).astype(jnp.float32))
    scores = scores + attn_b.reshape(()).astype(jnp.float32)
    attn = jax.nn.softmax(scores, axis=1)[..., None]
    pooled = jnp.sum(normed * attn, axis=1)
    return pooled @ fc_w.T.astype(jnp.float32) + fc_b.astype(jnp.float32)


if __name__ == "__main__":
    # Small deterministic shapes consistent with the module's head.
    B, S, H, C = 2, 40, 32, 31
    key = jax.random.PRNGKey(0)
    k_h, k_g, k_b, k_aw, k_ab, k_fw, k_fb = jax.random.split(key, 7)

    # Stand-in for wav2vec2 last_hidden_state (bf16 in HBM: bandwidth win).
    hidden_states = jax.random.normal(k_h, (B, S, H), dtype=jnp.float32
                                      ).astype(jnp.bfloat16)

    ln_gamma = 1.0 + 0.01 * jax.random.normal(k_g, (H,), dtype=jnp.float32)
    ln_beta = 0.01 * jax.random.normal(k_b, (H,), dtype=jnp.float32)
    attn_w = jax.random.normal(k_aw, (1, H), dtype=jnp.float32) / jnp.sqrt(H)
    attn_b = jax.random.normal(k_ab, (1,), dtype=jnp.float32) * 0.01
    fc_w = jax.random.normal(k_fw, (C, H), dtype=jnp.float32) / jnp.sqrt(H)
    fc_b = jax.random.normal(k_fb, (C,), dtype=jnp.float32) * 0.01

    ref = _reference_head(hidden_states, ln_gamma, ln_beta,
                          attn_w, attn_b, fc_w, fc_b)

    # Multi-tile streamed path (small tile target -> 3 tiles + padded-row mask).
    logits_tiled = wav2vec_intent_head(hidden_states, ln_gamma, ln_beta,
                                       attn_w, attn_b, fc_w, fc_b,
                                       seq_tile_target=16)
    jax.block_until_ready(logits_tiled)
    assert logits_tiled.shape == (B, C)
    assert bool(jnp.all(jnp.isfinite(logits_tiled)))
    assert jnp.allclose(logits_tiled, ref, rtol=2e-2, atol=2e-2)

    # Default single-tile path (production tile target).
    logits = wav2vec_intent_head(hidden_states, ln_gamma, ln_beta,
                                 attn_w, attn_b, fc_w, fc_b)
    jax.block_until_ready(logits)
    assert logits.shape == (B, C)
    assert bool(jnp.all(jnp.isfinite(logits)))
    assert jnp.allclose(logits, ref, rtol=2e-2, atol=2e-2)

    print("KERNEL_OK")
</pallas_src>

<mosaic_0001>
module attributes {stable_mosaic.version = 11 : i64} {
  func.func @kernel(%arg0: i32, %arg1: i32, %arg2: memref<1x16x32xbf16, #tpu.memory_space<vmem>>, %arg3: memref<1x32xf32, #tpu.memory_space<vmem>>, %arg4: memref<1xf32, #tpu.memory_space<smem>>, %arg5: memref<32x128xf32, #tpu.memory_space<vmem>>, %arg6: memref<1x128xf32, #tpu.memory_space<vmem>>, %arg7: memref<1x1x128xf32, #tpu.memory_space<vmem>>, %arg8: memref<1x1xf32, #tpu.memory_space<vmem>>, %arg9: memref<1x1xf32, #tpu.memory_space<vmem>>, %arg10: memref<1x32xf32, #tpu.memory_space<vmem>>) attributes {dimension_semantics = [#tpu.dimension_semantics<parallel>, #tpu.dimension_semantics<arbitrary>], iteration_bounds = array<i64: 2, 3>, scalar_prefetch = 0 : i64, scratch_operands = 3 : i64, tpu.core_type = #tpu.core_type<tc>, window_params = [{transform_indices = @transform_0, window_bounds = array<i64: 1, 16, 32>}, {pipeline_mode = #tpu.pipeline_mode<synchronous>, transform_indices = @transform_1, window_bounds = array<i64: 1, 32>}, {transform_indices = @transform_2, window_bounds = array<i64: 1>}, {pipeline_mode = #tpu.pipeline_mode<synchronous>, transform_indices = @transform_3, window_bounds = array<i64: 32, 128>}, {pipeline_mode = #tpu.pipeline_mode<synchronous>, transform_indices = @transform_4, window_bounds = array<i64: 1, 128>}, {transform_indices = @transform_5, window_bounds = array<i64: 1, 1, 128>}]} {
    %c0_i32 = arith.constant 0 : i32
    %0 = arith.cmpi eq, %arg1, %c0_i32 : i32
    %1 = arith.extui %0 : i1 to i32
    %c0_i32_0 = arith.constant 0 : i32
    %2 = arith.cmpi ne, %1, %c0_i32_0 : i32
    scf.if %2 {
      %cst_28 = arith.constant 0xFF800000 : f32
      %60 = vector.broadcast %cst_28 : f32 to vector<1x1xf32>
      %c0_29 = arith.constant 0 : index
      %c0_30 = arith.constant 0 : index
      %61 = vector.load %arg8[%c0_29, %c0_30] : memref<1x1xf32, #tpu.memory_space<vmem>>, vector<1x1xf32>
      tpu.vector_store %arg8[%c0_29, %c0_30], %60 {strides = array<i32>} : memref<1x1xf32, #tpu.memory_space<vmem>>, vector<1x1xf32>,
      %cst_31 = arith.constant 0.000000e+00 : f32
      %62 = vector.broadcast %cst_31 : f32 to vector<1x1xf32>
      %c0_32 = arith.constant 0 : index
      %c0_33 = arith.constant 0 : index
      %63 = vector.load %arg9[%c0_32, %c0_33] : memref<1x1xf32, #tpu.memory_space<vmem>>, vector<1x1xf32>
      tpu.vector_store %arg9[%c0_32, %c0_33], %62 {strides = array<i32>} : memref<1x1xf32, #tpu.memory_space<vmem>>, vector<1x1xf32>,
      %cst_34 = arith.constant 0.000000e+00 : f32
      %64 = vector.broadcast %cst_34 : f32 to vector<1x32xf32>
      %c0_35 = arith.constant 0 : index
      %c0_36 = arith.constant 0 : index
      %65 = vector.load %arg10[%c0_35, %c0_36] : memref<1x32xf32, #tpu.memory_space<vmem>>, vector<1x32xf32>
      tpu.vector_store %arg10[%c0_35, %c0_36], %64 {strides = array<i32>} : memref<1x32xf32, #tpu.memory_space<vmem>>, vector<1x32xf32>,
    } else {
    }
    %c0 = arith.constant 0 : index
    %c0_1 = arith.constant 0 : index
    %c0_2 = arith.constant 0 : index
    %3 = vector.load %arg2[%c0, %c0_1, %c0_2] : memref<1x16x32xbf16, #tpu.memory_space<vmem>>, vector<1x16x32xbf16>
    %4 = vector.shape_cast %3 : vector<1x16x32xbf16> to vector<16x32xbf16>
    %5 = arith.extf %4 : vector<16x32xbf16> to vector<16x32xf32>
    %cst = arith.constant dense<0.000000e+00> : vector<16xf32>
    %6 = vector.multi_reduction <add>, %5, %cst [1] : vector<16x32xf32> to vector<16xf32>
    %7 = vector.shape_cast %6 : vector<16xf32> to vector<16x1xf32>
    %cst_3 = arith.constant 3.200000e+01 : f32
    %8 = vector.broadcast %cst_3 : f32 to vector<16x1xf32>
    %9 = arith.divf %7, %8 : vector<16x1xf32>
    %10 = vector.broadcast %9 : vector<16x1xf32> to vector<16x32xf32>
    %11 = arith.subf %5, %10 : vector<16x32xf32>
    %12 = arith.mulf %11, %11 : vector<16x32xf32>
    %cst_4 = arith.constant dense<0.000000e+00> : vector<16xf32>
    %13 = vector.multi_reduction <add>, %12, %cst_4 [1] : vector<16x32xf32> to vector<16xf32>
    %14 = vector.shape_cast %13 : vector<16xf32> to vector<16x1xf32>
    %cst_5 = arith.constant 3.200000e+01 : f32
    %15 = vector.broadcast %cst_5 : f32 to vector<16x1xf32>
    %16 = arith.divf %14, %15 : vector<16x1xf32>
    %cst_6 = arith.constant 9.99999974E-6 : f32
    %17 = vector.broadcast %cst_6 : f32 to vector<16x1xf32>
    %18 = arith.addf %16, %17 : vector<16x1xf32>
    %19 = math.rsqrt %18 : vector<16x1xf32>
    %20 = vector.broadcast %19 : vector<16x1xf32> to vector<16x32xf32>
    %21 = arith.mulf %11, %20 : vector<16x32xf32>
    %c0_7 = arith.constant 0 : index
    %c0_8 = arith.constant 0 : index
    %22 = vector.load %arg3[%c0_7, %c0_8] : memref<1x32xf32, #tpu.memory_space<vmem>>, vector<1x32xf32>
    %cst_9 = arith.constant dense<0.000000e+00> : vector<1x16xf32>
    %23 = tpu.matmul %22, %21, %cst_9 {dimension_numbers = #tpu.dot_dimension_numbers<[1], [1], [0], [0], [0, 0, 1, 0], [], []>} : vector<1x32xf32>, vector<16x32xf32>, vector<1x16xf32> -> vector<1x16xf32>
    %c0_10 = arith.constant 0 : index
    %24 = memref.load %arg4[%c0_10] : memref<1xf32, #tpu.memory_space<smem>>
    %25 = vector.broadcast %24 : f32 to vector<1x16xf32>
    %26 = arith.addf %23, %25 : vector<1x16xf32>
    %27 = tpu.iota {dimensions = array<i32: 1>} : vector<1x16xi32>
    %c16_i32 = arith.constant 16 : i32
    %28 = arith.muli %arg1, %c16_i32 : i32
    %29 = vector.broadcast %28 : i32 to vector<1x16xi32>
    %30 = arith.addi %27, %29 : vector<1x16xi32>
    %c40_i32 = arith.constant 40 : i32
    %31 = vector.broadcast %c40_i32 : i32 to vector<1x16xi32>
    %32 = arith.cmpi slt, %30, %31 : vector<1x16xi32>
    %cst_11 = arith.constant -1.000000e+30 : f32
    %33 = vector.broadcast %cst_11 : f32 to vector<1x16xf32>
    %34 = arith.select %32, %26, %33 : vector<1x16xi1>, vector<1x16xf32>
    %c0_12 = arith.constant 0 : index
    %c0_13 = arith.constant 0 : index
    %35 = vector.load %arg8[%c0_12, %c0_13] : memref<1x1xf32, #tpu.memory_space<vmem>>, vector<1x1xf32>
    %cst_14 = arith.constant dense<0xFF800000> : vector<1xf32>
    %36 = vector.multi_reduction <maximumf>, %34, %cst_14 [1] : vector<1x16xf32> to vector<1xf32>
    %37 = vector.shape_cast %36 : vector<1xf32> to vector<1x1xf32>
    %38 = arith.maximumf %35, %37 : vector<1x1xf32>
    %39 = arith.subf %35, %38 : vector<1x1xf32>
    %40 = math.exp %39 : vector<1x1xf32>
    %41 = vector.broadcast %38 : vector<1x1xf32> to vector<1x16xf32>
    %42 = arith.subf %34, %41 : vector<1x16xf32>
    %43 = math.exp %42 : vector<1x16xf32>
    %c0_15 = arith.constant 0 : index
    %c0_16 = arith.constant 0 : index
    %44 = vector.load %arg9[%c0_15, %c0_16] : memref<1x1xf32, #tpu.memory_space<vmem>>, vector<1x1xf32>
    %45 = arith.mulf %40, %44 : vector<1x1xf32>
    %cst_17 = arith.constant dense<0.000000e+00> : vector<1xf32>
    %46 = vector.multi_reduction <add>, %43, %cst_17 [1] : vector<1x16xf32> to vector<1xf32>
    %47 = vector.shape_cast %46 : vector<1xf32> to vector<1x1xf32>
    %48 = arith.addf %45, %47 : vector<1x1xf32>
    %c0_18 = arith.constant 0 : index
    %c0_19 = arith.constant 0 : index
    %49 = vector.load %arg9[%c0_18, %c0_19] : memref<1x1xf32, #tpu.memory_space<vmem>>, vector<1x1xf32>
    tpu.vector_store %arg9[%c0_18, %c0_19], %48 {strides = array<i32>} : memref<1x1xf32, #tpu.memory_space<vmem>>, vector<1x1xf32>,
    %c0_20 = arith.constant 0 : index
    %c0_21 = arith.constant 0 : index
    %50 = vector.load %arg10[%c0_20, %c0_21] : memref<1x32xf32, #tpu.memory_space<vmem>>, vector<1x32xf32>
    %51 = vector.broadcast %40 : vector<1x1xf32> to vector<1x32xf32>
    %52 = arith.mulf %51, %50 : vector<1x32xf32>
    %cst_22 = arith.constant dense<0.000000e+00> : vector<1x32xf32>
    %53 = tpu.matmul %43, %21, %cst_22 {dimension_numbers = #tpu.dot_dimension_numbers<[1], [0], [0], [1], [0, 0, 1, 1], [], []>} : vector<1x16xf32>, vector<16x32xf32>, vector<1x32xf32> -> vector<1x32xf32>
    %54 = arith.addf %52, %53 : vector<1x32xf32>
    %c0_23 = arith.constant 0 : index
    %c0_24 = arith.constant 0 : index
    %55 = vector.load %arg10[%c0_23, %c0_24] : memref<1x32xf32, #tpu.memory_space<vmem>>, vector<1x32xf32>
    tpu.vector_store %arg10[%c0_23, %c0_24], %54 {strides = array<i32>} : memref<1x32xf32, #tpu.memory_space<vmem>>, vector<1x32xf32>,
    %c0_25 = arith.constant 0 : index
    %c0_26 = arith.constant 0 : index
    %56 = vector.load %arg8[%c0_25, %c0_26] : memref<1x1xf32, #tpu.memory_space<vmem>>, vector<1x1xf32>
    tpu.vector_store %arg8[%c0_25, %c0_26], %38 {strides = array<i32>} : memref<1x1xf32, #tpu.memory_space<vmem>>, vector<1x1xf32>,
    %c2_i32 = arith.constant 2 : i32
    %57 = arith.cmpi eq, %arg1, %c2_i32 : i32
    %58 = arith.extui %57 : i1 to i32
    %c0_i32_27 = arith.constant 0 : i32
    %59 = arith.cmpi ne, %58, %c0_i32_27 : i32
    scf.if %59 {
      %c0_28 = arith.constant 0 : index
      %c0_29 = arith.constant 0 : index
      %60 = vector.load %arg10[%c0_28, %c0_29] : memref<1x32xf32, #tpu.memory_space<vmem>>, vector<1x32xf32>
      %c0_30 = arith.constant 0 : index
      %c0_31 = arith.constant 0 : index
      %61 = vector.load %arg9[%c0_30, %c0_31] : memref<1x1xf32, #tpu.memory_space<vmem>>, vector<1x1xf32>
      %62 = vector.broadcast %61 : vector<1x1xf32> to vector<1x32xf32>
      %63 = arith.divf %60, %62 : vector<1x32xf32>
      %c0_32 = arith.constant 0 : index
      %c0_33 = arith.constant 0 : index
      %64 = vector.load %arg5[%c0_32, %c0_33] : memref<32x128xf32, #tpu.memory_space<vmem>>, vector<32x128xf32>
      %cst_34 = arith.constant dense<0.000000e+00> : vector<1x128xf32>
      %65 = tpu.matmul %63, %64, %cst_34 {dimension_numbers = #tpu.dot_dimension_numbers<[1], [0], [0], [1], [0, 0, 1, 1], [], []>} : vector<1x32xf32>, vector<32x128xf32>, vector<1x128xf32> -> vector<1x128xf32>
      %c0_35 = arith.constant 0 : index
      %c0_36 = arith.constant 0 : index
      %66 = vector.load %arg6[%c0_35, %c0_36] : memref<1x128xf32, #tpu.memory_space<vmem>>, vector<1x128xf32>
      %67 = arith.addf %65, %66 : vector<1x128xf32>
      %c0_37 = arith.constant 0 : index
      %c0_38 = arith.constant 0 : index
      %c0_39 = arith.constant 0 : index
      %68 = vector.load %arg7[%c0_37, %c0_38, %c0_39] : memref<1x1x128xf32, #tpu.memory_space<vmem>>, vector<1x1x128xf32>
      %69 = vector.shape_cast %68 : vector<1x1x128xf32> to vector<1x128xf32>
      %70 = vector.shape_cast %67 : vector<1x128xf32> to vector<1x1x128xf32>
      tpu.vector_store %arg7[%c0_37, %c0_38, %c0_39], %70 {strides = array<i32>} : memref<1x1x128xf32, #tpu.memory_space<vmem>>, vector<1x1x128xf32>,
    } else {
    }
    return
  }
  func.func @transform_0(%arg0: i32, %arg1: i32) -> (i32, i32, i32) {
    %c0_i32 = arith.constant 0 : i32
    %c0_i32_0 = arith.constant 0 : i32
    return %arg0, %arg1, %c0_i32 : i32, i32, i32
  }
  func.func @transform_1(%arg0: i32, %arg1: i32) -> (i32, i32) {
    %c0_i32 = arith.constant 0 : i32
    %c0_i32_0 = arith.constant 0 : i32
    %c0_i32_1 = arith.constant 0 : i32
    return %c0_i32, %c0_i32_0 : i32, i32
  }
  func.func @transform_2(%arg0: i32, %arg1: i32) -> i32 {
    %c0_i32 = arith.constant 0 : i32
    %c0_i32_0 = arith.constant 0 : i32
    return %c0_i32 : i32
  }
  func.func @transform_3(%arg0: i32, %arg1: i32) -> (i32, i32) {
    %c0_i32 = arith.constant 0 : i32
    %c0_i32_0 = arith.constant 0 : i32
    %c0_i32_1 = arith.constant 0 : i32
    return %c0_i32, %c0_i32_0 : i32, i32
  }
  func.func @transform_4(%arg0: i32, %arg1: i32) -> (i32, i32) {
    %c0_i32 = arith.constant 0 : i32
    %c0_i32_0 = arith.constant 0 : i32
    %c0_i32_1 = arith.constant 0 : i32
    return %c0_i32, %c0_i32_0 : i32, i32
  }
  func.func @transform_5(%arg0: i32, %arg1: i32) -> (i32, i32, i32) {
    %c0_i32 = arith.constant 0 : i32
    %c0_i32_0 = arith.constant 0 : i32
    %c0_i32_1 = arith.constant 0 : i32
    return %arg0, %c0_i32, %c0_i32_0 : i32, i32, i32
  }
}

</mosaic_0001>

<llo_original>
// kernel: tpu_custom_call.1
$region0: #{tpu_custom_call.1}
  #allocation0 [shape = 'u32[]', space=smem, size = 0x4, offset = 0x4, fixed_abs, tag = 'smem constant byte address 0x4 - core index']
  #allocation1 [shape = 'u32[144,128]{1,0:T(1,128)}', space=vmem, size = 0x12000, scoped, tag = 'internal scratch']
  #allocation2 [shape = 'f32[1,1]{1,0:T(1,128)}', space=vmem, size = 0x200, scoped, tag = 'scratch operand']
  #allocation3 [shape = 'f32[1,1]{1,0:T(1,128)}', space=vmem, size = 0x200, scoped, tag = 'scratch operand']
  #allocation4 [shape = 'f32[1,32]{1,0:T(1,128)}', space=vmem, size = 0x200, scoped, tag = 'scratch operand']
  #allocation5 [shape = 'f32[1]{0:T(128)S(6)}', space=smem, size = 0x200, scoped, tag = 'scoped memory for tpu_custom_call.1']
  %s0 = inlined_call_operand.vmem [shape: bf16[2,48,32], index: 0, kind: input, shape index: {}]
  %s1 = inlined_call_operand.vmem [shape: f32[1,32], index: 1, kind: input, shape index: {}]
  %s2 = inlined_call_operand.<no memory space> [shape: f32[1], index: 2, kind: input, shape index: {}]
  %s3 = inlined_call_operand.vmem [shape: f32[32,128], index: 3, kind: input, shape index: {}]
  %s4 = inlined_call_operand.vmem [shape: f32[1,128], index: 4, kind: input, shape index: {}]
  %s5 = inlined_call_operand.hbm [shape: f32[2,1,128], index: 5, kind: output, shape index: {}]
  %s6 = sld [smem:[#allocation0]]
  $region61: #{tpu_custom_call.1} parent=0
    _
  %s8 = ssub.s32 1, %s6
  %s9 = scalar_select 0, %s8, %s6
  %10 = sst [smem:[#allocation5]] %s2
  $region1: #{tpu_custom_call.1} parent=0
    #allocation6 [shape = 'u8[1024]{0}', space=vmem, size = 0x400, scoped, tag = 'output window, operand 0']
    #allocation7 [shape = 's32[2]{0}', space=sflag, size = 0x8, scoped, tag = 'scoped memory for tpu_custom_call.1']
    %11 = vsyncpa [#allocation7], 0
    %s12 = scalar_lea.sflag [#allocation7], 1
    %13 = vsyncpa %s12, 0
    loop: start=0, step=1, limit=8
    $region2: #{tpu_custom_call.1} parent=1 // loop_pre_header
      _
    $region3: #{tpu_custom_call.1} parent=1 // loop_header
      %s15 = sphi 0, %s19
      %p16 = scmp.ge.s32.totalorder %s15, 8
      %s22 = sphi 0, %s34
      %s23 = sphi 0, %s30
      %s24 = sphi 0, %s22
      %s25 = sphi 0, %s23
      %s26 = sphi 0, %s24
      %s27 = sphi 0, %s25
      %s39 = sphi 0, %s41
      %s42 = sphi 0, %s39
      %s43 = sphi 0, %s42
      %s59 = sphi 0, %s43
      %s63 = sphi 0, %s63
      %s65 = sphi 0, %s63
      %s66 = sphi 0, %s65
      %s80 = sphi 0, %s66
      %s84 = sphi 0, %s84
      %s86 = sphi 0, %s84
      %s87 = sphi 0, %s86
      %s101 = sphi 0, %s87
      %s105 = sphi 0, %s105
      %s107 = sphi 0, %s105
      %s108 = sphi 0, %s107
      %s122 = sphi 0, %s108
      %s126 = sphi 0, %s126
      %s128 = sphi 0, %s126
      %s129 = sphi 0, %s128
      %s143 = sphi 0, %s129
      %s149 = sphi 0, %s151
      %s152 = sphi 0, %s149
      %s153 = sphi 0, %s152
      %s169 = sphi 0, %s153
    $region4: #{tpu_custom_call.1} parent=1 // loop_header_branch
      %18 = sbr.rel (%p16) target = $region8
    $region5: #{tpu_custom_call.1} parent=1 // loop_body
      %s20 = ssub.s32 %s15, 1
      %s21 = ssub.s32 %s15, 2
      %s28 = sadd.s32 1, %s23
      %p29 = scmp.ge.s32.totalorder %s28, 3
      %s30 = scalar_select %p29, 0, %s28
      %s31 = sadd.s32 1, %s22
      %s32 = scalar_select %p29, %s31, %s22
      %p33 = scmp.ge.s32.totalorder %s32, 2
      %s34 = scalar_select %p33, 0, %s32
      %s35 = ssub.s32 %s22, %s34
      %s36 = ssub.s32 %s23, %s30
      %s37 = sor.u32 %s35, %s36
      %p38 = scmp.eq.s32.totalorder %s37, 0
      %s40 = sadd.s32 %s39, 1
      %s41 = scalar_select %p38, %s39, %s40
      %p44 = pneg %p38
      %p45 = scmp.eq.s32.totalorder %s15, 5
      %p46 = por %p44, %p45
      %p47 = scmp.ne.s32.totalorder %s39, %s42
      %p48 = scmp.eq.s32.totalorder %s15, 0
      %p49 = por %p47, %p48
      %p50 = scmp.ne.s32.totalorder %s39, %s42
      %p51 = scmp.eq.s32.totalorder %s20, 5
      %p52 = por %p50, %p51
      %p53 = scmp.ne.s32.totalorder %s42, %s43
      %p54 = scmp.eq.s32.totalorder %s20, 0
      %p55 = por %p53, %p54
      %p56 = scmp.ne.s32.totalorder %s42, %s43
      %p57 = scmp.eq.s32.totalorder %s21, 5
      %p58 = por %p56, %p57
      %p60 = scmp.ne.s32.totalorder %s43, %s59
      %p61 = scmp.eq.s32.totalorder %s21, 0
      %p62 = por %p60, %p61
      %s64 = sadd.s32 %s63, 1
      %p67 = scmp.eq.s32.totalorder %s15, 5
      %p68 = scmp.ne.s32.totalorder %s63, %s65
      %p69 = scmp.eq.s32.totalorder %s15, 0
      %p70 = por %p68, %p69
      %p71 = scmp.ne.s32.totalorder %s63, %s65
      %p72 = scmp.eq.s32.totalorder %s20, 5
      %p73 = por %p71, %p72
      %p74 = scmp.ne.s32.totalorder %s65, %s66
      %p75 = scmp.eq.s32.totalorder %s20, 0
      %p76 = por %p74, %p75
      %p77 = scmp.ne.s32.totalorder %s65, %s66
      %p78 = scmp.eq.s32.totalorder %s21, 5
      %p79 = por %p77, %p78
      %p81 = scmp.ne.s32.totalorder %s66, %s80
      %p82 = scmp.eq.s32.totalorder %s21, 0
      %p83 = por %p81, %p82
      %s85 = sadd.s32 %s84, 1
      %p88 = scmp.eq.s32.totalorder %s15, 5
      %p89 = scmp.ne.s32.totalorder %s84, %s86
      %p90 = scmp.eq.s32.totalorder %s15, 0
      %p91 = por %p89, %p90
      %p92 = scmp.ne.s32.totalorder %s84, %s86
      %p93 = scmp.eq.s32.totalorder %s20, 5
      %p94 = por %p92, %p93
      %p95 = scmp.ne.s32.totalorder %s86, %s87
      %p96 = scmp.eq.s32.totalorder %s20, 0
      %p97 = por %p95, %p96
      %p98 = scmp.ne.s32.totalorder %s86, %s87
      %p99 = scmp.eq.s32.totalorder %s21, 5
      %p100 = por %p98, %p99
      %p102 = scmp.ne.s32.totalorder %s87, %s101
      %p103 = scmp.eq.s32.totalorder %s21, 0
      %p104 = por %p102, %p103
      %s106 = sadd.s32 %s105, 1
      %p109 = scmp.eq.s32.totalorder %s15, 5
      %p110 = scmp.ne.s32.totalorder %s105, %s107
      %p111 = scmp.eq.s32.totalorder %s15, 0
      %p112 = por %p110, %p111
      %p113 = scmp.ne.s32.totalorder %s105, %s107
      %p114 = scmp.eq.s32.totalorder %s20, 5
      %p115 = por %p113, %p114
      %p116 = scmp.ne.s32.totalorder %s107, %s108
      %p117 = scmp.eq.s32.totalorder %s20, 0
      %p118 = por %p116, %p117
      %p119 = scmp.ne.s32.totalorder %s107, %s108
      %p120 = scmp.eq.s32.totalorder %s21, 5
      %p121 = por %p119, %p120
      %p123 = scmp.ne.s32.totalorder %s108, %s122
      %p124 = scmp.eq.s32.totalorder %s21, 0
      %p125 = por %p123, %p124
      %s127 = sadd.s32 %s126, 1
      %p130 = scmp.eq.s32.totalorder %s15, 5
      %p131 = scmp.ne.s32.totalorder %s126, %s128
      %p132 = scmp.eq.s32.totalorder %s15, 0
      %p133 = por %p131, %p132
      %p134 = scmp.ne.s32.totalorder %s126, %s128
      %p135 = scmp.eq.s32.totalorder %s20, 5
      %p136 = por %p134, %p135
      %p137 = scmp.ne.s32.totalorder %s128, %s129
      %p138 = scmp.eq.s32.totalorder %s20, 0
      %p139 = por %p137, %p138
      %p140 = scmp.ne.s32.totalorder %s128, %s129
      %p141 = scmp.eq.s32.totalorder %s21, 5
      %p142 = por %p140, %p141
      %p144 = scmp.ne.s32.totalorder %s129, %s143
      %p145 = scmp.eq.s32.totalorder %s21, 0
      %p146 = por %p144, %p145
      %s147 = ssub.s32 %s22, %s34
      %p148 = scmp.eq.s32.totalorder %s147, 0
      %s150 = sadd.s32 %s149, 1
      %s151 = scalar_select %p148, %s149, %s150
      %p154 = pneg %p148
      %p155 = scmp.eq.s32.totalorder %s15, 5
      %p156 = por %p154, %p155
      %p157 = scmp.ne.s32.totalorder %s149, %s152
      %p158 = scmp.eq.s32.totalorder %s15, 0
      %p159 = por %p157, %p158
      %p160 = scmp.ne.s32.totalorder %s149, %s152
      %p161 = scmp.eq.s32.totalorder %s20, 5
      %p162 = por %p160, %p161
      %p163 = scmp.ne.s32.totalorder %s152, %s153
      %p164 = scmp.eq.s32.totalorder %s20, 0
      %p165 = por %p163, %p164
      %p166 = scmp.ne.s32.totalorder %s152, %s153
      %p167 = scmp.eq.s32.totalorder %s21, 5
      %p168 = por %p166, %p167
      %p170 = scmp.ne.s32.totalorder %s153, %s169
      %p171 = scmp.eq.s32.totalorder %s21, 0
      %p172 = por %p170, %p171
      %p173 = scmp.le.s32.totalorder 1, %s15
      %p174 = scmp.lt.s32.totalorder %s15, 7
      %p175 = pnand %p173, %p174
      %p176 = pneg %p175
      // Predicated region
      $region9: #{tpu_custom_call.1} parent=5 // pred_check
        _
      $region10: #{tpu_custom_call.1} parent=5 // pred_check_branch
        %178 = sbr.rel (%p175) target = $region12
      $region11: #{tpu_custom_call.1} parent=5 // pred_region
        %s179 = ssub.s32 %s15, 1
        // Predicated region
        $region13: #{tpu_custom_call.1} parent=11 // pred_check
          %p180 = pneg %p76
        $region14: #{tpu_custom_call.1} parent=11 // pred_check_branch
          %182 = sbr.rel (%p180) target = $region16
        $region15: #{tpu_custom_call.1} parent=11 // pred_region
          _
        $region16: #{tpu_custom_call.1} parent=11 // pred_fallthru
          _
        // Predicated region
        $region17: #{tpu_custom_call.1} parent=11 // pred_check
          %p183 = pneg %p97
        $region18: #{tpu_custom_call.1} parent=11 // pred_check_branch
          %185 = sbr.rel (%p183) target = $region20
        $region19: #{tpu_custom_call.1} parent=11 // pred_region
          _
        $region20: #{tpu_custom_call.1} parent=11 // pred_fallthru
          _
        // Predicated region
        $region21: #{tpu_custom_call.1} parent=11 // pred_check
          %p186 = pneg %p118
        $region22: #{tpu_custom_call.1} parent=11 // pred_check_branch
          %188 = sbr.rel (%p186) target = $region24
        $region23: #{tpu_custom_call.1} parent=11 // pred_region
          _
        $region24: #{tpu_custom_call.1} parent=11 // pred_fallthru
          _
        // Predicated region
        $region25: #{tpu_custom_call.1} parent=11 // pred_check
          %p189 = pneg %p139
        $region26: #{tpu_custom_call.1} parent=11 // pred_check_branch
          %191 = sbr.rel (%p189) target = $region28
        $region27: #{tpu_custom_call.1} parent=11 // pred_region
          _
        $region28: #{tpu_custom_call.1} parent=11 // pred_fallthru
          _
      $region12: #{tpu_custom_call.1} parent=5 // pred_fallthru
        _
      %p192 = scmp.lt.s32.totalorder %s15, 6
      // Predicated region
      $region29: #{tpu_custom_call.1} parent=5 // pred_check
        %p193 = pneg %p192
      $region30: #{tpu_custom_call.1} parent=5 // pred_check_branch
        %195 = sbr.rel (%p193) target = $region32
      $region31: #{tpu_custom_call.1} parent=5 // pred_region
        // Predicated region
        $region33: #{tpu_custom_call.1} parent=31 // pred_check
          %p196 = pneg %p49
        $region34: #{tpu_custom_call.1} parent=31 // pred_check_branch
          %198 = sbr.rel (%p196) target = $region36
        $region35: #{tpu_custom_call.1} parent=31 // pred_region
          %s199 = smul.u32 2, %s23
          %p200 = scmp.lt.s32.totalorder %s22, 1
          %s201 = scalar_select %p200, %s22, 1
          %p202 = scmp.lt.s32.totalorder %s199, 5
          %s203 = scalar_select %p202, %s199, 5
          %s204 = smul.addr %s201, 6
          %s205 = sadd.s32 %s203, %s204
          %s206 = smul.addr %s205, 4
          %s207 = scalar_lea.vmem %s0, %s206
          %s208 = smul.u32 2, %s23
        $region36: #{tpu_custom_call.1} parent=31 // pred_fallthru
          _
      $region32: #{tpu_custom_call.1} parent=5 // pred_fallthru
        _
      %p209 = scmp.le.s32.totalorder 1, %s15
      %p210 = scmp.lt.s32.totalorder %s15, 7
      %p211 = pnand %p209, %p210
      %p212 = pneg %p211
      // Predicated region
      $region37: #{tpu_custom_call.1} parent=5 // pred_check
        _
      $region38: #{tpu_custom_call.1} parent=5 // pred_check_branch
        %214 = sbr.rel (%p211) target = $region40
      $region39: #{tpu_custom_call.1} parent=5 // pred_region
        %s215 = ssub.s32 %s15, 1
        %s216 = smul.u32 2, %s25
        %p217 = scmp.lt.s32.totalorder %s24, 1
        %s218 = scalar_select %p217, %s24, 1
        %p219 = scmp.lt.s32.totalorder %s216, 5
        %s220 = scalar_select %p219, %s216, 5
        %s221 = smul.addr %s218, 6
        %s222 = sadd.s32 %s220, %s221
        %s223 = smul.addr %s222, 4
        %s224 = scalar_lea.vmem %s0, %s223
        %p225 = pneg %p55
        %p226 = pneg %p52
        %p227 = pneg %p76
        %p228 = pneg %p73
        %p229 = pneg %p97
        %p230 = pneg %p94
        %p231 = pneg %p118
        %p232 = pneg %p115
        %p233 = pneg %p139
        %p234 = pneg %p136
        %p235 = pneg %p165
        %p236 = pneg %p162
        %s237 = sand.u32 %s152, 1
        %s238 = scalar_lea.sflag [#allocation7], %s237
        %s239 = sand.u32 %s152, 1
        %s240 = scalar_lea.vmem [#allocation6], %s239
        %s241 = smul.u32 2, %s25
        %p242 = scmp.lt.s32.totalorder %s24, 1
        %s243 = scalar_select %p242, %s24, 1
        %p244 = scmp.lt.s32.totalorder %s241, 5
        %s245 = scalar_select %p244, %s241, 5
        %s246 = smul.addr %s243, 6
        %s247 = sadd.s32 %s245, %s246
        %s248 = smul.addr %s247, 4
        %s249 = scalar_lea.vmem %s0, %s248
        %s250 = smul.u32 2, %s25
        %p251 = scmp.eq.s32.totalorder %s25, 0
        // Predicated region
        $region41: #{tpu_custom_call.1} parent=39 // pred_check
          %p252 = pneg %p251
        $region42: #{tpu_custom_call.1} parent=39 // pred_check_branch
          %254 = sbr.rel (%p252) target = $region44
        $region43: #{tpu_custom_call.1} parent=39 // pred_region
          %vm255 = vcmask 0
          %256 = vst.msk [vmem:[#allocation2] sm:$0x1] %vm255, -inf
          %257 = vst.msk [vmem:[#allocation3] sm:$0x1] %vm255, 0.0
          %vm258 = vcmask 253952
          %259 = vst.msk [vmem:[#allocation4] sm:$0x1] %vm258, 0.0
        $region44: #{tpu_custom_call.1} parent=39 // pred_fallthru
          _
        %v260 = vld [vmem:[%s249] sm:$0xf]
        %v261 = vld [vmem:[%s249 + $0x4] sm:$0xf]
        %v262 = vunpack.c.l.bf16 %v260
        %v263 = vunpack.c.l.bf16 %v261
        %vm264 = vcmask 261120
        %v265 = vsel %vm264, %v262, 0.0
        %266 = vadd.xlane.f32.xlu0 %v265
        %v267 = vpop.xlane.xlu0 %266
        %v268 = vsel %vm264, %v263, 0.0
        %269 = vadd.xlane.f32.xlu0 %v268
        %v270 = vpop.xlane.xlu0 %269
        %v271 = vrcp.pop 32.0
        %v272 = vmul.f32 %v267, %v271
        %v273 = vmul.f32 %v270, %v271
        %v274 = vsub.f32 %v262, %v272
        %v275 = vsub.f32 %v263, %v273
        %v276 = vmul.f32 %v274, %v274
        %v277 = vmul.f32 %v275, %v275
        %v278 = vsel %vm264, %v276, 0.0
        %279 = vadd.xlane.f32.xlu0 %v278
        %v280 = vpop.xlane.xlu0 %279
        %v281 = vsel %vm264, %v277, 0.0
        %282 = vadd.xlane.f32.xlu0 %v281
        %v283 = vpop.xlane.xlu0 %282
        %v284 = vmul.f32 %v280, %v271
        %v285 = vmul.f32 %v283, %v271
        %v286 = vadd.f32 %v284, 1e-05
        %v287 = vadd.f32 %v285, 1e-05
        %v288 = vrsqrt.pop %v286
        %v289 = vrsqrt.pop %v287
        %v290 = vmul.f32 %v274, %v288
        %v291 = vmul.f32 %v275, %v289
        %v292 = vld [vmem:[%s1] sm:$0x1]
        %s293 = sld [smem:[#allocation5]]
        %v294 = vstv %s293
        %v296 = vsel %vm264, %v292, 0
        %v299 = vsel %vm264, %v290, 0
        %v302 = vsel %vm264, %v291, 0
        %304 = vmatprep.subr.mxu0 0.0
        %305 = vmatpush1.xpose.msra.mxu0 %v299
        %306 = vmatprep.subr.mxu0 0.0
        %307 = vmatpush1.xpose.msra.mxu0 %v302
        %308 = vmatprep.subr.mxu0 0.0
        %309 = vmatpush1.xpose.msra.mxu0 0.0
        %310 = vmatprep.subr.mxu0 0.0
        %311 = vmatpush1.xpose.msra.mxu0 0.0
        %312 = vmatprep.subr.mxu0 0.0
        %313 = vmatpush1.xpose.msra.mxu0 0.0
        %314 = vmatprep.subr.mxu0 0.0
        %315 = vmatpush1.xpose.msra.mxu0 0.0
        %316 = vmatprep.subr.mxu0 0.0
        %317 = vmatpush1.xpose.msra.mxu0 0.0
        %318 = vmatprep.subr.mxu0 0.0
        %319 = vmatpush1.xpose.msra.mxu0 0.0
        %320 = vmatprep.subr.mxu0 0.0
        %321 = vmatpush1.xpose.msra.mxu0 0.0
        %322 = vmatprep.subr.mxu0 0.0
        %323 = vmatpush1.xpose.msra.mxu0 0.0
        %324 = vmatprep.subr.mxu0 0.0
        %325 = vmatpush1.xpose.msra.mxu0 0.0
        %326 = vmatprep.subr.mxu0 0.0
        %327 = vmatpush1.xpose.msra.mxu0 0.0
        %328 = vmatprep.subr.mxu0 0.0
        %329 = vmatpush1.xpose.msra.mxu0 0.0
        %330 = vmatprep.subr.mxu0 0.0
        %331 = vmatpush1.xpose.msra.mxu0 0.0
        %332 = vmatprep.subr.mxu0 0.0
        %333 = vmatpush1.xpose.msra.mxu0 0.0
        %334 = vmatprep.subr.mxu0 0.0
        %335 = vmatpush1.xpose.msra.mxu0 0.0
        %336 = vmatprep.subr.mxu0 0.0
        %337 = vmatpush1.xpose.msra.mxu0 0.0
        %338 = vmatprep.subr.mxu0 0.0
        %339 = vmatpush1.xpose.msra.mxu0 0.0
        %340 = vmatprep.subr.mxu0 0.0
        %341 = vmatpush1.xpose.msra.mxu0 0.0
        %342 = vmatprep.subr.mxu0 0.0
        %343 = vmatpush1.xpose.msra.mxu0 0.0
        %344 = vmatprep.subr.mxu0 0.0
        %345 = vmatpush1.xpose.msra.mxu0 0.0
        %346 = vmatprep.subr.mxu0 0.0
        %347 = vmatpush1.xpose.msra.mxu0 0.0
        %348 = vmatprep.subr.mxu0 0.0
        %349 = vmatpush1.xpose.msra.mxu0 0.0
        %350 = vmatprep.subr.mxu0 0.0
        %351 = vmatpush1.xpose.msra.mxu0 0.0
        %352 = vmatprep.subr.mxu0 0.0
        %353 = vmatpush1.xpose.msra.mxu0 0.0
        %354 = vmatprep.subr.mxu0 0.0
        %355 = vmatpush1.xpose.msra.mxu0 0.0
        %356 = vmatprep.subr.mxu0 0.0
        %357 = vmatpush1.xpose.msra.mxu0 0.0
        %358 = vmatprep.subr.mxu0 0.0
        %359 = vmatpush1.xpose.msra.mxu0 0.0
        %360 = vmatprep.subr.mxu0 0.0
        %361 = vmatpush1.xpose.msra.mxu0 0.0
        %362 = vmatprep.subr.mxu0 0.0
        %363 = vmatpush1.xpose.msra.mxu0 0.0
        %364 = vmatprep.subr.mxu0 0.0
        %365 = vmatpush1.xpose.msra.mxu0 0.0
        %366 = vmatprep.subr.mxu0 0.0
        %367 = vmatpush1.xpose.msra.mxu0 0.0
        %368 = vmatprep.mubr.f32.mxu0 0.0
        %369 = vmatmul.mubr.f32.gmra.mrb[0].mxu0 %v296
        %v370 = vpop.f32.mrb[0].mxu0
        %v371 = vadd.f32 %v294, %v370
        %v372 = vpop.f32.mrb[0].mxu0
        %373 = vdwg.mxu0
        %v374 = vlaneseq
        %v375 = vand.u32 %v374, 127
        %s376 = smul.u32 %s25, 16
        %v377 = vstv %s376
        %v378 = vadd.s32 %v375, %v377
        %vm379 = vcmp.lt.s32.totalorder %v378, 40
        %v380 = vsel %vm379, %v371, -1e+30
        %v381 = vld [vmem:[#allocation2] sm:$0x1]
        %vm382 = vcmask 122880
        %v383 = vsel %vm382, %v380, -inf
        %384 = vmax.xlane.f32.xlu0 %v383
        %v385 = vpop.xlane.xlu0 %384
        %v386 = vmax.f32 %v381, %v385
        %v387 = vsub.f32 %v381, %v386
        %v388 = vmul.f32 %v387, 1.442695
        %v389 = vpow.pop %v388
        %391 = vset.pattern.permute.xlu0 0
        %392 = vperm.xlu0 %391, %v386
        %v393 = vpop.permute.xlu0 %392
        %v395 = vlaneseq
        %v396 = vshrl.u32 %v395, 7
        %v397 = vsub.s32 0, %v396
        %v398 = vrot.slane %v393, %v397
        %v399 = vsub.f32 %v380, %v398
        %v400 = vmul.f32 %v399, 1.442695
        %v401 = vpow.pop %v400
        %v402 = vld [vmem:[#allocation3] sm:$0x1]
        %v403 = vmul.f32 %v389, %v402
        %v404 = vsel %vm382, %v401, 0.0
        %405 = vadd.xlane.f32.xlu0 %v404
        %v406 = vpop.xlane.xlu0 %405
        %v407 = vadd.f32 %v403, %v406
        %vm408 = vcmask 0
        %409 = vst.msk [vmem:[#allocation3] sm:$0x1] %vm408, %v407
        %v410 = vld [vmem:[#allocation4] sm:$0x1]
        %412 = vset.pattern.permute.xlu0 0
        %413 = vperm.xlu0 %412, %v389
        %v414 = vpop.permute.xlu0 %413
        %v416 = vlaneseq
        %v417 = vshrl.u32 %v416, 7
        %v418 = vsub.s32 0, %v417
        %v419 = vrot.slane %v414, %v418
        %v420 = vmul.f32 %v419, %v410
        %vm421 = vcmask 130048
        %v423 = vsel %vm421, %v401, 0
        %425 = vmatprep.subr.mxu0 0.0
        %426 = vmatpush1.msra.mxu0 %v290
        %427 = vmatprep.subr.mxu0 0.0
        %428 = vmatpush1.msra.mxu0 %v291
        %429 = vmatprep.subr.mxu0 0.0
        %430 = vmatpush1.msra.mxu0 0.0
        %431 = vmatprep.subr.mxu0 0.0
        %432 = vmatpush1.msra.mxu0 0.0
        %433 = vmatprep.subr.mxu0 0.0
        %434 = vmatpush1.msra.mxu0 0.0
        %435 = vmatprep.subr.mxu0 0.0
        %436 = vmatpush1.msra.mxu0 0.0
        %437 = vmatprep.subr.mxu0 0.0
        %438 = vmatpush1.msra.mxu0 0.0
        %439 = vmatprep.subr.mxu0 0.0
        %440 = vmatpush1.msra.mxu0 0.0
        %441 = vmatprep.subr.mxu0 0.0
        %442 = vmatpush1.msra.mxu0 0.0
        %443 = vmatprep.subr.mxu0 0.0
        %444 = vmatpush1.msra.mxu0 0.0
        %445 = vmatprep.subr.mxu0 0.0
        %446 = vmatpush1.msra.mxu0 0.0
        %447 = vmatprep.subr.mxu0 0.0
        %448 = vmatpush1.msra.mxu0 0.0
        %449 = vmatprep.subr.mxu0 0.0
        %450 = vmatpush1.msra.mxu0 0.0
        %451 = vmatprep.subr.mxu0 0.0
        %452 = vmatpush1.msra.mxu0 0.0
        %453 = vmatprep.subr.mxu0 0.0
        %454 = vmatpush1.msra.mxu0 0.0
        %455 = vmatprep.subr.mxu0 0.0
        %456 = vmatpush1.msra.mxu0 0.0
        %457 = vmatprep.subr.mxu0 0.0
        %458 = vmatpush1.msra.mxu0 0.0
        %459 = vmatprep.subr.mxu0 0.0
        %460 = vmatpush1.msra.mxu0 0.0
        %461 = vmatprep.subr.mxu0 0.0
        %462 = vmatpush1.msra.mxu0 0.0
        %463 = vmatprep.subr.mxu0 0.0
        %464 = vmatpush1.msra.mxu0 0.0
        %465 = vmatprep.subr.mxu0 0.0
        %466 = vmatpush1.msra.mxu0 0.0
        %467 = vmatprep.subr.mxu0 0.0
        %468 = vmatpush1.msra.mxu0 0.0
        %469 = vmatprep.subr.mxu0 0.0
        %470 = vmatpush1.msra.mxu0 0.0
        %471 = vmatprep.subr.mxu0 0.0
        %472 = vmatpush1.msra.mxu0 0.0
        %473 = vmatprep.subr.mxu0 0.0
        %474 = vmatpush1.msra.mxu0 0.0
        %475 = vmatprep.subr.mxu0 0.0
        %476 = vmatpush1.msra.mxu0 0.0
        %477 = vmatprep.subr.mxu0 0.0
        %478 = vmatpush1.msra.mxu0 0.0
        %479 = vmatprep.subr.mxu0 0.0
        %480 = vmatpush1.msra.mxu0 0.0
        %481 = vmatprep.subr.mxu0 0.0
        %482 = vmatpush1.msra.mxu0 0.0
        %483 = vmatprep.subr.mxu0 0.0
        %484 = vmatpush1.msra.mxu0 0.0
        %485 = vmatprep.subr.mxu0 0.0
        %486 = vmatpush1.msra.mxu0 0.0
        %487 = vmatprep.subr.mxu0 0.0
        %488 = vmatpush1.msra.mxu0 0.0
        %489 = vmatprep.mubr.f32.mxu0 0.0
        %490 = vmatmul.mubr.f32.gmra.mrb[0].mxu0 %v423
        %v491 = vpop.f32.mrb[0].mxu0
        %v492 = vadd.f32 0.0, %v491
        %v493 = vpop.f32.mrb[0].mxu0
        %494 = vdwg.mxu0
        %v495 = vadd.f32 %v420, %v492
        %vm496 = vcmask 253952
        %497 = vst.msk [vmem:[#allocation4] sm:$0x1] %vm496, %v495
        %498 = vst.msk [vmem:[#allocation2] sm:$0x1] %vm408, %v386
        %p499 = scmp.eq.s32.totalorder %s25, 2
        // Predicated region
        $region45: #{tpu_custom_call.1} parent=39 // pred_check
          %p500 = pneg %p499
        $region46: #{tpu_custom_call.1} parent=39 // pred_check_branch
          %502 = sbr.rel (%p500) target = $region48
        $region47: #{tpu_custom_call.1} parent=39 // pred_region
          %v503 = vld [vmem:[#allocation4] sm:$0x1]
          %v504 = vld [vmem:[#allocation3] sm:$0x1]
          %506 = vset.pattern.permute.xlu0 0
          %507 = vperm.xlu0 %506, %v504
          %v508 = vpop.permute.xlu0 %507
          %v510 = vlaneseq
          %v511 = vshrl.u32 %v510, 7
          %v512 = vsub.s32 0, %v511
          %v513 = vrot.slane %v508, %v512
          %v514 = vrcp.pop %v513
          %v515 = vmul.f32 %v503, %v514
          %v516 = vld [vmem:[%s3] sm:$0xff]
          %v517 = vld [vmem:[%s3 + $0x8] sm:$0xff]
          %v518 = vld [vmem:[%s3 + $0x10] sm:$0xff]
          %v519 = vld [vmem:[%s3 + $0x18] sm:$0xff]
          %v520 = vld [vmem:[%s4] sm:$0x1]
          %v522 = vsel %vm264, %v515, 0
          %524 = vmatprep.subr.mxu0 0.0
          %525 = vmatpush1.msra.mxu0 %v516
          %526 = vmatprep.subr.mxu0 0.0
          %527 = vmatpush1.msra.mxu0 %v517
          %528 = vmatprep.subr.mxu0 0.0
          %529 = vmatpush1.msra.mxu0 %v518
          %530 = vmatprep.subr.mxu0 0.0
          %531 = vmatpush1.msra.mxu0 %v519
          %532 = vmatprep.subr.mxu0 0.0
          %533 = vmatpush1.msra.mxu0 0.0
          %534 = vmatprep.subr.mxu0 0.0
          %535 = vmatpush1.msra.mxu0 0.0
          %536 = vmatprep.subr.mxu0 0.0
          %537 = vmatpush1.msra.mxu0 0.0
          %538 = vmatprep.subr.mxu0 0.0
          %539 = vmatpush1.msra.mxu0 0.0
          %540 = vmatprep.subr.mxu0 0.0
          %541 = vmatpush1.msra.mxu0 0.0
          %542 = vmatprep.subr.mxu0 0.0
          %543 = vmatpush1.msra.mxu0 0.0
          %544 = vmatprep.subr.mxu0 0.0
          %545 = vmatpush1.msra.mxu0 0.0
          %546 = vmatprep.subr.mxu0 0.0
          %547 = vmatpush1.msra.mxu0 0.0
          %548 = vmatprep.subr.mxu0 0.0
          %549 = vmatpush1.msra.mxu0 0.0
          %550 = vmatprep.subr.mxu0 0.0
          %551 = vmatpush1.msra.mxu0 0.0
          %552 = vmatprep.subr.mxu0 0.0
          %553 = vmatpush1.msra.mxu0 0.0
          %554 = vmatprep.subr.mxu0 0.0
          %555 = vmatpush1.msra.mxu0 0.0
          %556 = vmatprep.subr.mxu0 0.0
          %557 = vmatpush1.msra.mxu0 0.0
          %558 = vmatprep.subr.mxu0 0.0
          %559 = vmatpush1.msra.mxu0 0.0
          %560 = vmatprep.subr.mxu0 0.0
          %561 = vmatpush1.msra.mxu0 0.0
          %562 = vmatprep.subr.mxu0 0.0
          %563 = vmatpush1.msra.mxu0 0.0
          %564 = vmatprep.subr.mxu0 0.0
          %565 = vmatpush1.msra.mxu0 0.0
          %566 = vmatprep.subr.mxu0 0.0
          %567 = vmatpush1.msra.mxu0 0.0
          %568 = vmatprep.subr.mxu0 0.0
          %569 = vmatpush1.msra.mxu0 0.0
          %570 = vmatprep.subr.mxu0 0.0
          %571 = vmatpush1.msra.mxu0 0.0
          %572 = vmatprep.subr.mxu0 0.0
          %573 = vmatpush1.msra.mxu0 0.0
          %574 = vmatprep.subr.mxu0 0.0
          %575 = vmatpush1.msra.mxu0 0.0
          %576 = vmatprep.subr.mxu0 0.0
          %577 = vmatpush1.msra.mxu0 0.0
          %578 = vmatprep.subr.mxu0 0.0
          %579 = vmatpush1.msra.mxu0 0.0
          %580 = vmatprep.subr.mxu0 0.0
          %581 = vmatpush1.msra.mxu0 0.0
          %582 = vmatprep.subr.mxu0 0.0
          %583 = vmatpush1.msra.mxu0 0.0
          %584 = vmatprep.subr.mxu0 0.0
          %585 = vmatpush1.msra.mxu0 0.0
          %586 = vmatprep.subr.mxu0 0.0
          %587 = vmatpush1.msra.mxu0 0.0
          %588 = vmatprep.mubr.f32.mxu0 0.0
          %589 = vmatmul.mubr.f32.gmra.mrb[0].mxu0 %v522
          %v590 = vpop.f32.mrb[0].mxu0
          %v591 = vadd.f32 %v520, %v590
          %v592 = vpop.f32.mrb[0].mxu0
          %593 = vdwg.mxu0
          %594 = vst [vmem:[%s240] sm:$0x1] %v591
        $region48: #{tpu_custom_call.1} parent=39 // pred_fallthru
          _
        %s595 = sand.u32 %s152, 1
        %s596 = scalar_lea.sflag [#allocation7], %s595
        %s597 = sand.u32 %s152, 1
        %s598 = scalar_lea.vmem [#allocation6], %s597
        // Predicated region
        $region49: #{tpu_custom_call.1} parent=39 // pred_check
          %p599 = pneg %p162
        $region50: #{tpu_custom_call.1} parent=39 // pred_check_branch
          %601 = sbr.rel (%p599) target = $region52
        $region51: #{tpu_custom_call.1} parent=39 // pred_region
          %s603 = ssub.s32 16, 16
          %604 = vsyncadd %s596, %s603
          %s605 = smul.addr %s24, 16
          %s606 = scalar_lea.hbm %s5, %s605
          %s608 = sshll.u32 %s598, 4
          %s609 = int_to_ptr.vmem [resolvable:$true] %s608
          %611 = dma.vmem_to_hbm [thread:$0]  %s609, 16, %s606, %s596
        $region52: #{tpu_custom_call.1} parent=39 // pred_fallthru
          _
      $region40: #{tpu_custom_call.1} parent=5 // pred_fallthru
        _
      %p612 = scmp.le.s32.totalorder 2, %s15
      // Predicated region
      $region53: #{tpu_custom_call.1} parent=5 // pred_check
        %p613 = pneg %p612
      $region54: #{tpu_custom_call.1} parent=5 // pred_check_branch
        %615 = sbr.rel (%p613) target = $region56
      $region55: #{tpu_custom_call.1} parent=5 // pred_region
        %s616 = ssub.s32 %s15, 2
        // Predicated region
        $region57: #{tpu_custom_call.1} parent=55 // pred_check
          %p617 = pneg %p168
        $region58: #{tpu_custom_call.1} parent=55 // pred_check_branch
          %619 = sbr.rel (%p617) target = $region60
        $region59: #{tpu_custom_call.1} parent=55 // pred_region
          %s620 = sand.u32 %s153, 1
          %s621 = scalar_lea.sflag [#allocation7], %s620
          %s622 = sand.u32 %s153, 1
          %s623 = scalar_lea.vmem [#allocation6], %s622
          %624 = dma.done %s621, 16
        $region60: #{tpu_custom_call.1} parent=55 // pred_fallthru
          _
      $region56: #{tpu_custom_call.1} parent=5 // pred_fallthru
        _
    $region6: #{tpu_custom_call.1} parent=1 // loop_footer
      %s19 = sadd.s32 1, %s15
    $region7: #{tpu_custom_call.1} parent=1 // loop_footer_branch
      %14 = sbr.rel target = $region3
    $region8: #{tpu_custom_call.1} parent=1 // loop_exit
      _
    %625 = vsyncpa [#allocation7], 1
    %s626 = scalar_lea.sflag [#allocation7], 1
    %627 = vsyncpa %s626, 1

</llo_original>
